<compile_context>
chip_gen: v6e
topology: v6e:2x2x1
jax: 0.10.0
libtpu: 0.0.40
codegen_flags: <defaults>
</compile_context>

<pallas_src>
import jax
import jax.numpy as jnp
from jax import lax
from jax.experimental import pallas as pl
from jax.experimental.pallas import tpu as pltpu

_LANE = 128      # lane width (last dim alignment)
_SUBLANE = 8     # sublane granularity (second-to-last dim alignment)


def _round_up(x, m):
    return (x + m - 1) // m * m


def _lstm_chunk_kernel(x_ref, wi_ref, bgate_ref, wh_ref, wfc_ref, bfc_ref,
                       out_ref, h_ref, c_ref):
    """One (batch_tile, time_chunk) grid step of the LSTM recurrence.

    x_ref    : (S_chunk, Bt, D_in)   time-major input chunk (streamed from HBM)
    wi_ref   : (D_in, 4*Hp)          input -> gates weights (gate-blocked, lane-aligned)
    bgate_ref: (1, 4*Hp)             combined gate bias (b_i2h + b_h2h)
    wh_ref   : (Hp, 4*Hp)            hidden -> gates weights
    wfc_ref  : (Hp, Op)              final fully-connected weights (lane-padded O)
    bfc_ref  : (1, Op)               final fully-connected bias
    out_ref  : (Bt, Op)              fc(h_S), written only at the last time chunk
    h_ref,c_ref : (Bt, Hp) f32 VMEM scratch, persist across time chunks
    """
    t_chunk = pl.program_id(1)
    n_chunk = pl.num_programs(1)
    s_chunk = x_ref.shape[0]
    hp = wh_ref.shape[0]

    @pl.when(t_chunk == 0)
    def _():
        h_ref[...] = jnp.zeros_like(h_ref)
        c_ref[...] = jnp.zeros_like(c_ref)

    def step(t, carry):
        h, c = carry
        # Fused input projection + recurrent projection (MXU, f32 accumulation).
        # The gate slab never touches HBM; only the small x chunk is streamed.
        gates = (jnp.dot(x_ref[t].astype(wi_ref.dtype), wi_ref[...],
                         preferred_element_type=jnp.float32)
                 + bgate_ref[...]
                 + jnp.dot(h.astype(wh_ref.dtype), wh_ref[...],
                           preferred_element_type=jnp.float32))
        # Hp is a multiple of 128 -> whole-vreg slices.  One EUP pass for i|f|o.
        ifo = jax.nn.sigmoid(gates[:, :3 * hp])
        g = jnp.tanh(gates[:, 3 * hp:])
        i_g = ifo[:, 0 * hp:1 * hp]
        f_g = ifo[:, 1 * hp:2 * hp]
        o_g = ifo[:, 2 * hp:3 * hp]
        c = f_g * c + i_g * g
        h = o_g * jnp.tanh(c)
        return h, c

    # Serial recurrence over this time chunk; no unroll (serial dep limits ILP and
    # full unroll at batch_tile=128 spills vregs).
    h, c = lax.fori_loop(0, s_chunk, step, (h_ref[...], c_ref[...]))
    h_ref[...] = h
    c_ref[...] = c

    @pl.when(t_chunk == n_chunk - 1)
    def _():
        out_ref[...] = (jnp.dot(h.astype(wfc_ref.dtype), wfc_ref[...],
                                preferred_element_type=jnp.float32)
                        + bfc_ref[...]).astype(out_ref.dtype)


def lstm_forward(x, params, *, batch_tile=None, seq_chunk=32,
                 weight_dtype=None, vmem_limit_bytes=None):
    """x: (batch, seq_len, input_size) float32. Returns (batch, output_size)."""
    w_i2h, b_i2h, w_h2h, b_h2h, w_fc, b_fc = params
    B, S, D_in = x.shape
    H = w_h2h.shape[0]
    O = w_fc.shape[1]

    Hp = _round_up(H, _LANE)          # lane-aligned gate blocks
    Op = _round_up(O, _LANE)          # lane-dense output store
    Bp = _round_up(B, _SUBLANE)       # sublane-aligned batch
    if batch_tile is None:
        batch_tile = min(Bp, 128)     # 128 rows fill v5e MXU; use 256 on v6e/v7x
    bt = _round_up(min(batch_tile, Bp), _SUBLANE)
    Bp = _round_up(Bp, bt)
    n_bt = Bp // bt

    # Time chunk: largest divisor of S that is <= seq_chunk, so no padded timesteps
    # are ever executed (no masking needed inside the recurrence).
    sc = 1
    for d in range(1, min(S, seq_chunk) + 1):
        if S % d == 0:
            sc = d
    n_tc = S // sc

    wdt = weight_dtype if weight_dtype is not None else x.dtype

    # ---- one-time weight / bias preprocessing (wrapper side) ----
    def pad_gate_cols(w):             # (fan_in, 4H) -> (fan_in, 4Hp), zero pad per gate
        w4 = w.reshape(w.shape[0], 4, H)
        w4 = jnp.pad(w4, ((0, 0), (0, 0), (0, Hp - H)))
        return w4.reshape(w.shape[0], 4 * Hp)

    wi_p = pad_gate_cols(w_i2h).astype(wdt)                                   # (D_in, 4Hp)
    wh_p = jnp.pad(pad_gate_cols(w_h2h), ((0, Hp - H), (0, 0))).astype(wdt)   # (Hp,  4Hp)
    bgate = jnp.pad((b_i2h + b_h2h).reshape(4, H), ((0, 0), (0, Hp - H)))
    bgate = bgate.reshape(1, 4 * Hp).astype(jnp.float32)                      # (1, 4Hp)
    wfc_p = jnp.pad(w_fc, ((0, Hp - H), (0, Op - O))).astype(wdt)             # (Hp, Op)
    bfc_p = jnp.pad(b_fc, (0, Op - O)).reshape(1, Op).astype(jnp.float32)     # (1, Op)

    # Time-major, batch-padded input: only x is streamed into the kernel.
    xt = jnp.transpose(jnp.pad(x, ((0, Bp - B), (0, 0), (0, 0))), (1, 0, 2))  # (S, Bp, D_in)

    cp_kwargs = {}
    if vmem_limit_bytes is not None:
        cp_kwargs["vmem_limit_bytes"] = vmem_limit_bytes

    out_p = pl.pallas_call(
        _lstm_chunk_kernel,
        out_shape=jax.ShapeDtypeStruct((Bp, Op), x.dtype),
        grid_spec=pltpu.PrefetchScalarGridSpec(
            num_scalar_prefetch=0,
            grid=(n_bt, n_tc),                                   # (batch tiles, time chunks)
            in_specs=[
                pl.BlockSpec((sc, bt, D_in), lambda b, t: (t, b, 0)),   # x chunk
                pl.BlockSpec((D_in, 4 * Hp), lambda b, t: (0, 0)),      # w_i2h
                pl.BlockSpec((1, 4 * Hp), lambda b, t: (0, 0)),         # gate bias
                pl.BlockSpec((Hp, 4 * Hp), lambda b, t: (0, 0)),        # w_h2h
                pl.BlockSpec((Hp, Op), lambda b, t: (0, 0)),            # w_fc
                pl.BlockSpec((1, Op), lambda b, t: (0, 0)),             # b_fc
            ],
            out_specs=pl.BlockSpec((bt, Op), lambda b, t: (b, 0)),
            scratch_shapes=[
                pltpu.VMEM((bt, Hp), jnp.float32),   # h (persists across time chunks)
                pltpu.VMEM((bt, Hp), jnp.float32),   # c
            ],
        ),
        compiler_params=pltpu.CompilerParams(
            # Batch tiles independent -> shard across TensorCores; time chunks carry
            # h/c in scratch -> sequential ("arbitrary").
            dimension_semantics=("parallel", "arbitrary"),
            **cp_kwargs,
        ),
    )(xt, wi_p, bgate, wh_p, wfc_p, bfc_p)
    return out_p[:B, :O]


def init_params(key, input_size, hidden_size, output_size):
    """Deterministic init mimicking PyTorch nn.Linear default (uniform +-1/sqrt(fan_in))."""
    ks = jax.random.split(key, 6)

    def lin(kw, kb, fan_in, fan_out):
        bound = 1.0 / jnp.sqrt(fan_in)
        # stored transposed: (fan_in, fan_out) so the kernel does x @ W
        w = jax.random.uniform(kw, (fan_in, fan_out), jnp.float32, -bound, bound)
        b = jax.random.uniform(kb, (fan_out,), jnp.float32, -bound, bound)
        return w, b

    w_i2h, b_i2h = lin(ks[0], ks[1], input_size, 4 * hidden_size)
    w_h2h, b_h2h = lin(ks[2], ks[3], hidden_size, 4 * hidden_size)
    w_fc, b_fc = lin(ks[4], ks[5], hidden_size, output_size)
    return (w_i2h, b_i2h, w_h2h, b_h2h, w_fc, b_fc)


def lstm_reference(x, params):
    """Pure-JAX reference matching the PyTorch forward exactly (gate order i, f, o, g)."""
    w_i2h, b_i2h, w_h2h, b_h2h, w_fc, b_fc = params
    B, S, _ = x.shape
    H = w_h2h.shape[0]
    h = jnp.zeros((B, H), jnp.float32)
    c = jnp.zeros((B, H), jnp.float32)
    for t in range(S):
        gates = x[:, t, :] @ w_i2h + b_i2h + h @ w_h2h + b_h2h
        i, f, o, g = jnp.split(gates, 4, axis=1)
        i, f, o, g = jax.nn.sigmoid(i), jax.nn.sigmoid(f), jax.nn.sigmoid(o), jnp.tanh(g)
        c = f * c + i * g
        h = o * jnp.tanh(c)
    return h @ w_fc + b_fc


if __name__ == "__main__":
    batch, seq_len, input_size, hidden_size, output_size = 2, 8, 16, 32, 8

    key = jax.random.PRNGKey(0)
    k_x, k_p = jax.random.split(key)
    x = jax.random.normal(k_x, (batch, seq_len, input_size), jnp.float32)
    params = init_params(k_p, input_size, hidden_size, output_size)

    fwd = jax.jit(lstm_forward)
    out = jax.block_until_ready(fwd(x, params))
    ref = lstm_reference(x, params)

    assert out.shape == (batch, output_size)
    assert jnp.allclose(out, ref, atol=1e-4, rtol=1e-4), \
        f"max abs err = {float(jnp.max(jnp.abs(out - ref)))}"

    print("KERNEL_OK")
</pallas_src>

<mosaic_0001>
module attributes {stable_mosaic.version = 11 : i64} {
  func.func @_lstm_chunk_kernel(%arg0: i32, %arg1: i32, %arg2: memref<8x8x16xf32, #tpu.memory_space<vmem>>, %arg3: memref<16x512xf32, #tpu.memory_space<vmem>>, %arg4: memref<1x512xf32, #tpu.memory_space<vmem>>, %arg5: memref<128x512xf32, #tpu.memory_space<vmem>>, %arg6: memref<128x128xf32, #tpu.memory_space<vmem>>, %arg7: memref<1x128xf32, #tpu.memory_space<vmem>>, %arg8: memref<8x128xf32, #tpu.memory_space<vmem>>, %arg9: memref<8x128xf32, #tpu.memory_space<vmem>>, %arg10: memref<8x128xf32, #tpu.memory_space<vmem>>) attributes {dimension_semantics = [#tpu.dimension_semantics<parallel>, #tpu.dimension_semantics<arbitrary>], iteration_bounds = array<i64: 1, 1>, scalar_prefetch = 0 : i64, scratch_operands = 2 : i64, tpu.core_type = #tpu.core_type<tc>, window_params = [{transform_indices = @transform_0, window_bounds = array<i64: 8, 8, 16>}, {pipeline_mode = #tpu.pipeline_mode<synchronous>, transform_indices = @transform_1, window_bounds = array<i64: 16, 512>}, {pipeline_mode = #tpu.pipeline_mode<synchronous>, transform_indices = @transform_2, window_bounds = array<i64: 1, 512>}, {pipeline_mode = #tpu.pipeline_mode<synchronous>, transform_indices = @transform_3, window_bounds = array<i64: 128, 512>}, {pipeline_mode = #tpu.pipeline_mode<synchronous>, transform_indices = @transform_4, window_bounds = array<i64: 128, 128>}, {pipeline_mode = #tpu.pipeline_mode<synchronous>, transform_indices = @transform_5, window_bounds = array<i64: 1, 128>}, {transform_indices = @transform_6, window_bounds = array<i64: 8, 128>}]} {
    %c0_i32 = arith.constant 0 : i32
    %0 = arith.cmpi eq, %arg1, %c0_i32 : i32
    %1 = arith.extui %0 : i1 to i32
    %c0_i32_0 = arith.constant 0 : i32
    %2 = arith.cmpi ne, %1, %c0_i32_0 : i32
    scf.if %2 {
      %cst = arith.constant 0.000000e+00 : f32
      %12 = vector.broadcast %cst : f32 to vector<8x128xf32>
      %c0_12 = arith.constant 0 : index
      %c0_13 = arith.constant 0 : index
      %13 = vector.load %arg9[%c0_12, %c0_13] : memref<8x128xf32, #tpu.memory_space<vmem>>, vector<8x128xf32>
      tpu.vector_store %arg9[%c0_12, %c0_13], %12 {strides = array<i32>} : memref<8x128xf32, #tpu.memory_space<vmem>>, vector<8x128xf32>,
      %cst_14 = arith.constant 0.000000e+00 : f32
      %14 = vector.broadcast %cst_14 : f32 to vector<8x128xf32>
      %c0_15 = arith.constant 0 : index
      %c0_16 = arith.constant 0 : index
      %15 = vector.load %arg10[%c0_15, %c0_16] : memref<8x128xf32, #tpu.memory_space<vmem>>, vector<8x128xf32>
      tpu.vector_store %arg10[%c0_15, %c0_16], %14 {strides = array<i32>} : memref<8x128xf32, #tpu.memory_space<vmem>>, vector<8x128xf32>,
    } else {
    }
    %c0 = arith.constant 0 : index
    %c0_1 = arith.constant 0 : index
    %3 = vector.load %arg9[%c0, %c0_1] : memref<8x128xf32, #tpu.memory_space<vmem>>, vector<8x128xf32>
    %c0_2 = arith.constant 0 : index
    %c0_3 = arith.constant 0 : index
    %4 = vector.load %arg10[%c0_2, %c0_3] : memref<8x128xf32, #tpu.memory_space<vmem>>, vector<8x128xf32>
    %c0_i32_4 = arith.constant 0 : i32
    %c8_i32 = arith.constant 8 : i32
    %5 = arith.addi %c0_i32_4, %c8_i32 : i32
    %c1_i32 = arith.constant 1 : i32
    %6:2 = scf.for %arg11 = %c0_i32_4 to %5 step %c1_i32 iter_args(%arg12 = %3, %arg13 = %4) -> (vector<8x128xf32>, vector<8x128xf32>)  : i32 {
      %12 = arith.index_cast %arg11 : i32 to index
      %c0_12 = arith.constant 0 : index
      %c0_13 = arith.constant 0 : index
      %13 = vector.load %arg2[%12, %c0_12, %c0_13] : memref<8x8x16xf32, #tpu.memory_space<vmem>>, vector<1x8x16xf32>
      %14 = vector.shape_cast %13 : vector<1x8x16xf32> to vector<8x16xf32>
      %c0_14 = arith.constant 0 : index
      %c0_15 = arith.constant 0 : index
      %15 = vector.load %arg3[%c0_14, %c0_15] : memref<16x512xf32, #tpu.memory_space<vmem>>, vector<16x512xf32>
      %cst = arith.constant dense<0.000000e+00> : vector<8x512xf32>
      %16 = tpu.matmul %14, %15, %cst {dimension_numbers = #tpu.dot_dimension_numbers<[1], [0], [0], [1], [0, 0, 1, 1], [], []>} : vector<8x16xf32>, vector<16x512xf32>, vector<8x512xf32> -> vector<8x512xf32>
      %c0_16 = arith.constant 0 : index
      %c0_17 = arith.constant 0 : index
      %17 = vector.load %arg4[%c0_16, %c0_17] : memref<1x512xf32, #tpu.memory_space<vmem>>, vector<1x512xf32>
      %18 = vector.broadcast %17 : vector<1x512xf32> to vector<8x512xf32>
      %19 = arith.addf %16, %18 : vector<8x512xf32>
      %c0_18 = arith.constant 0 : index
      %c0_19 = arith.constant 0 : index
      %20 = vector.load %arg5[%c0_18, %c0_19] : memref<128x512xf32, #tpu.memory_space<vmem>>, vector<128x512xf32>
      %cst_20 = arith.constant dense<0.000000e+00> : vector<8x512xf32>
      %21 = tpu.matmul %arg12, %20, %cst_20 {dimension_numbers = #tpu.dot_dimension_numbers<[1], [0], [0], [1], [0, 0, 1, 1], [], []>} : vector<8x128xf32>, vector<128x512xf32>, vector<8x512xf32> -> vector<8x512xf32>
      %22 = arith.addf %19, %21 : vector<8x512xf32>
      %23 = vector.extract_strided_slice %22 {offsets = [0, 0], sizes = [8, 384], strides = [1, 1]} : vector<8x512xf32> to vector<8x384xf32>
      %24 = arith.negf %23 : vector<8x384xf32>
      %25 = math.exp %24 : vector<8x384xf32>
      %cst_21 = arith.constant 1.000000e+00 : f32
      %26 = vector.broadcast %cst_21 : f32 to vector<8x384xf32>
      %27 = arith.addf %26, %25 : vector<8x384xf32>
      %28 = arith.divf %26, %27 : vector<8x384xf32>
      %29 = vector.extract_strided_slice %22 {offsets = [0, 384], sizes = [8, 128], strides = [1, 1]} : vector<8x512xf32> to vector<8x128xf32>
      %30 = math.tanh %29 : vector<8x128xf32>
      %31 = vector.extract_strided_slice %28 {offsets = [0, 0], sizes = [8, 128], strides = [1, 1]} : vector<8x384xf32> to vector<8x128xf32>
      %32 = vector.extract_strided_slice %28 {offsets = [0, 128], sizes = [8, 128], strides = [1, 1]} : vector<8x384xf32> to vector<8x128xf32>
      %33 = vector.extract_strided_slice %28 {offsets = [0, 256], sizes = [8, 128], strides = [1, 1]} : vector<8x384xf32> to vector<8x128xf32>
      %34 = arith.mulf %32, %arg13 : vector<8x128xf32>
      %35 = arith.mulf %31, %30 : vector<8x128xf32>
      %36 = arith.addf %34, %35 : vector<8x128xf32>
      %37 = math.tanh %36 : vector<8x128xf32>
      %38 = arith.mulf %33, %37 : vector<8x128xf32>
      scf.yield %38, %36 : vector<8x128xf32>, vector<8x128xf32>
    }
    %c8_i32_5 = arith.constant 8 : i32
    %c0_6 = arith.constant 0 : index
    %c0_7 = arith.constant 0 : index
    %7 = vector.load %arg9[%c0_6, %c0_7] : memref<8x128xf32, #tpu.memory_space<vmem>>, vector<8x128xf32>
    tpu.vector_store %arg9[%c0_6, %c0_7], %6#0 {strides = array<i32>} : memref<8x128xf32, #tpu.memory_space<vmem>>, vector<8x128xf32>,
    %c0_8 = arith.constant 0 : index
    %c0_9 = arith.constant 0 : index
    %8 = vector.load %arg10[%c0_8, %c0_9] : memref<8x128xf32, #tpu.memory_space<vmem>>, vector<8x128xf32>
    tpu.vector_store %arg10[%c0_8, %c0_9], %6#1 {strides = array<i32>} : memref<8x128xf32, #tpu.memory_space<vmem>>, vector<8x128xf32>,
    %c0_i32_10 = arith.constant 0 : i32
    %9 = arith.cmpi eq, %arg1, %c0_i32_10 : i32
    %10 = arith.extui %9 : i1 to i32
    %c0_i32_11 = arith.constant 0 : i32
    %11 = arith.cmpi ne, %10, %c0_i32_11 : i32
    scf.if %11 {
      %c0_12 = arith.constant 0 : index
      %c0_13 = arith.constant 0 : index
      %12 = vector.load %arg6[%c0_12, %c0_13] : memref<128x128xf32, #tpu.memory_space<vmem>>, vector<128x128xf32>
      %cst = arith.constant dense<0.000000e+00> : vector<8x128xf32>
      %13 = tpu.matmul %6#0, %12, %cst {dimension_numbers = #tpu.dot_dimension_numbers<[1], [0], [0], [1], [0, 0, 1, 1], [], []>} : vector<8x128xf32>, vector<128x128xf32>, vector<8x128xf32> -> vector<8x128xf32>
      %c0_14 = arith.constant 0 : index
      %c0_15 = arith.constant 0 : index
      %14 = vector.load %arg7[%c0_14, %c0_15] : memref<1x128xf32, #tpu.memory_space<vmem>>, vector<1x128xf32>
      %15 = vector.broadcast %14 : vector<1x128xf32> to vector<8x128xf32>
      %16 = arith.addf %13, %15 : vector<8x128xf32>
      %c0_16 = arith.constant 0 : index
      %c0_17 = arith.constant 0 : index
      %17 = vector.load %arg8[%c0_16, %c0_17] : memref<8x128xf32, #tpu.memory_space<vmem>>, vector<8x128xf32>
      tpu.vector_store %arg8[%c0_16, %c0_17], %16 {strides = array<i32>} : memref<8x128xf32, #tpu.memory_space<vmem>>, vector<8x128xf32>,
    } else {
    }
    return
  }
  func.func @transform_0(%arg0: i32, %arg1: i32) -> (i32, i32, i32) {
    %c0_i32 = arith.constant 0 : i32
    %c0_i32_0 = arith.constant 0 : i32
    return %arg1, %arg0, %c0_i32 : i32, i32, i32
  }
  func.func @transform_1(%arg0: i32, %arg1: i32) -> (i32, i32) {
    %c0_i32 = arith.constant 0 : i32
    %c0_i32_0 = arith.constant 0 : i32
    %c0_i32_1 = arith.constant 0 : i32
    return %c0_i32, %c0_i32_0 : i32, i32
  }
  func.func @transform_2(%arg0: i32, %arg1: i32) -> (i32, i32) {
    %c0_i32 = arith.constant 0 : i32
    %c0_i32_0 = arith.constant 0 : i32
    %c0_i32_1 = arith.constant 0 : i32
    return %c0_i32, %c0_i32_0 : i32, i32
  }
  func.func @transform_3(%arg0: i32, %arg1: i32) -> (i32, i32) {
    %c0_i32 = arith.constant 0 : i32
    %c0_i32_0 = arith.constant 0 : i32
    %c0_i32_1 = arith.constant 0 : i32
    return %c0_i32, %c0_i32_0 : i32, i32
  }
  func.func @transform_4(%arg0: i32, %arg1: i32) -> (i32, i32) {
    %c0_i32 = arith.constant 0 : i32
    %c0_i32_0 = arith.constant 0 : i32
    %c0_i32_1 = arith.constant 0 : i32
    return %c0_i32, %c0_i32_0 : i32, i32
  }
  func.func @transform_5(%arg0: i32, %arg1: i32) -> (i32, i32) {
    %c0_i32 = arith.constant 0 : i32
    %c0_i32_0 = arith.constant 0 : i32
    %c0_i32_1 = arith.constant 0 : i32
    return %c0_i32, %c0_i32_0 : i32, i32
  }
  func.func @transform_6(%arg0: i32, %arg1: i32) -> (i32, i32) {
    %c0_i32 = arith.constant 0 : i32
    %c0_i32_0 = arith.constant 0 : i32
    return %arg0, %c0_i32 : i32, i32
  }
}

</mosaic_0001>

<llo_original>
// kernel: lstm_forward.1
$region0: #{lstm_forward.1}
  #allocation0 [shape = 'u32[]', space=smem, size = 0x4, offset = 0x4, fixed_abs, tag = 'smem constant byte address 0x4 - core index']
  #allocation1 [shape = 'u32[144,128]{1,0:T(1,128)}', space=vmem, size = 0x12000, scoped, tag = 'internal scratch']
  #allocation2 [shape = 'f32[8,128]{1,0:T(8,128)}', space=vmem, size = 0x1000, scoped, tag = 'scratch operand']
  #allocation3 [shape = 'f32[8,128]{1,0:T(8,128)}', space=vmem, size = 0x1000, scoped, tag = 'scratch operand']
  %s0 = inlined_call_operand.vmem [shape: f32[8,8,16], index: 0, kind: input, shape index: {}]
  %s1 = inlined_call_operand.vmem [shape: f32[16,512], index: 1, kind: input, shape index: {}]
  %s2 = inlined_call_operand.vmem [shape: f32[1,512], index: 2, kind: input, shape index: {}]
  %s3 = inlined_call_operand.vmem [shape: f32[128,512], index: 3, kind: input, shape index: {}]
  %s4 = inlined_call_operand.vmem [shape: f32[128,128], index: 4, kind: input, shape index: {}]
  %s5 = inlined_call_operand.vmem [shape: f32[1,128], index: 5, kind: input, shape index: {}]
  %s6 = inlined_call_operand.vmem [shape: f32[8,128], index: 6, kind: output, shape index: {}]
  %s7 = sld [smem:[#allocation0]]
  $region49: #{lstm_forward.1} parent=0
    _
  %s9 = ssub.s32 1, %s7
  %s10 = scalar_select 0, %s9, %s7
  // Predicated region
  $region2: #{lstm_forward.1} parent=0 // pred_check
    _
  $region3: #{lstm_forward.1} parent=0 // pred_check_branch
    %12 = sbr.rel (0) target = $region5
  $region4: #{lstm_forward.1} parent=0 // pred_region
    _
  $region5: #{lstm_forward.1} parent=0 // pred_fallthru
    _
  // Predicated region
  $region6: #{lstm_forward.1} parent=0 // pred_check
    _
  $region7: #{lstm_forward.1} parent=0 // pred_check_branch
    %14 = sbr.rel (0) target = $region9
  $region8: #{lstm_forward.1} parent=0 // pred_region
    _
  $region9: #{lstm_forward.1} parent=0 // pred_fallthru
    _
  // Predicated region
  $region10: #{lstm_forward.1} parent=0 // pred_check
    _
  $region11: #{lstm_forward.1} parent=0 // pred_check_branch
    %16 = sbr.rel (0) target = $region13
  $region12: #{lstm_forward.1} parent=0 // pred_region
    _
  $region13: #{lstm_forward.1} parent=0 // pred_fallthru
    _
  // Predicated region
  $region14: #{lstm_forward.1} parent=0 // pred_check
    _
  $region15: #{lstm_forward.1} parent=0 // pred_check_branch
    %18 = sbr.rel (0) target = $region17
  $region16: #{lstm_forward.1} parent=0 // pred_region
    _
  $region17: #{lstm_forward.1} parent=0 // pred_fallthru
    _
  // Predicated region
  $region18: #{lstm_forward.1} parent=0 // pred_check
    _
  $region19: #{lstm_forward.1} parent=0 // pred_check_branch
    %20 = sbr.rel (0) target = $region21
  $region20: #{lstm_forward.1} parent=0 // pred_region
    _
  $region21: #{lstm_forward.1} parent=0 // pred_fallthru
    _
  // Predicated region
  $region22: #{lstm_forward.1} parent=0 // pred_check
    _
  $region23: #{lstm_forward.1} parent=0 // pred_check_branch
    %22 = sbr.rel (0) target = $region25
  $region24: #{lstm_forward.1} parent=0 // pred_region
    _
  $region25: #{lstm_forward.1} parent=0 // pred_fallthru
    _
  %p23 = scmp.eq.s32.totalorder 0, 0
  // Predicated region
  $region26: #{lstm_forward.1} parent=0 // pred_check
    %p24 = pneg %p23
  $region27: #{lstm_forward.1} parent=0 // pred_check_branch
    %26 = sbr.rel (%p24) target = $region29
  $region28: #{lstm_forward.1} parent=0 // pred_region
    %27 = vst [vmem:[#allocation2] sm:$0xff] 0.0
    %28 = vst [vmem:[#allocation3] sm:$0xff] 0.0
  $region29: #{lstm_forward.1} parent=0 // pred_fallthru
    _
  %v29 = vld [vmem:[#allocation2] sm:$0xff]
  %v30 = vld [vmem:[#allocation3] sm:$0xff]
  loop: start=0, step=1, limit=8
  $region30: #{lstm_forward.1} parent=0 // loop_pre_header
    _
  $region31: #{lstm_forward.1} parent=0 // loop_header
    %s32 = sphi 0, %s36
    %p33 = scmp.ge.s32.totalorder %s32, 8
    %v37 = vphi %v29, %v451
    %v38 = vphi %v30, %v449
  $region32: #{lstm_forward.1} parent=0 // loop_header_branch
    %35 = sbr.rel (%p33) target = $region36
  $region33: #{lstm_forward.1} parent=0 // loop_body
    %s39 = smul.u32 %s32, 8
    %s40 = scalar_lea.vmem %s0, %s39
    %v41 = vld [vmem:[%s40] sm:$0xff]
    %v42 = vld [vmem:[%s1] sm:$0xff]
    %v43 = vld [vmem:[%s1 + $0x8] sm:$0xff]
    %v44 = vld [vmem:[%s1 + $0x10] sm:$0xff]
    %v45 = vld [vmem:[%s1 + $0x18] sm:$0xff]
    %v46 = vld [vmem:[%s1 + $0x20] sm:$0xff]
    %v47 = vld [vmem:[%s1 + $0x28] sm:$0xff]
    %v48 = vld [vmem:[%s1 + $0x30] sm:$0xff]
    %v49 = vld [vmem:[%s1 + $0x38] sm:$0xff]
    %v50 = vld [vmem:[%s2] sm:$0xf]
    %v52 = vlaneseq
    %v53 = vshrl.u32 %v52, 7
    %v54 = vsub.s32 0, %v53
    %v55 = vrot.slane %v50, %v54
    %v56 = vlaneseq
    %v57 = vshrl.u32 %v56, 7
    %v58 = vsub.s32 1, %v57
    %v59 = vrot.slane %v50, %v58
    %v60 = vlaneseq
    %v61 = vshrl.u32 %v60, 7
    %v62 = vsub.s32 2, %v61
    %v63 = vrot.slane %v50, %v62
    %v64 = vlaneseq
    %v65 = vshrl.u32 %v64, 7
    %v66 = vsub.s32 3, %v65
    %v67 = vrot.slane %v50, %v66
    %vm72 = vcmask 130048
    %v74 = vsel %vm72, %v41, 0
    %76 = vmatprep.subr.mxu0 0.0
    %77 = vmatpush1.msra.mxu0 0.0
    %78 = vmatprep.subr.mxu0 0.0
    %79 = vmatpush1.msra.mxu0 0.0
    %80 = vmatprep.subr.mxu0 0.0
    %81 = vmatpush1.msra.mxu0 0.0
    %82 = vmatprep.subr.mxu0 0.0
    %83 = vmatpush1.msra.mxu0 0.0
    %84 = vmatprep.subr.mxu0 0.0
    %85 = vmatpush1.msra.mxu0 0.0
    %86 = vmatprep.subr.mxu0 0.0
    %87 = vmatpush1.msra.mxu0 0.0
    %88 = vmatprep.subr.mxu0 0.0
    %89 = vmatpush1.msra.mxu0 0.0
    %90 = vmatprep.subr.mxu0 0.0
    %91 = vmatpush1.msra.mxu0 0.0
    %92 = vmatprep.subr.mxu0 0.0
    %93 = vmatpush1.msra.mxu0 0.0
    %94 = vmatprep.subr.mxu0 0.0
    %95 = vmatpush1.msra.mxu0 0.0
    %96 = vmatprep.subr.mxu0 0.0
    %97 = vmatpush1.msra.mxu0 0.0
    %98 = vmatprep.subr.mxu0 0.0
    %99 = vmatpush1.msra.mxu0 0.0
    %100 = vmatprep.subr.mxu0 0.0
    %101 = vmatpush1.msra.mxu0 0.0
    %102 = vmatprep.subr.mxu0 0.0
    %103 = vmatpush1.msra.mxu0 0.0
    %104 = vmatprep.subr.mxu0 %v47
    %105 = vmatpush1.msra.mxu0 %v46
    %106 = vmatprep.subr.mxu0 %v43
    %107 = vmatpush1.msra.mxu0 %v42
    %108 = vmatprep.subr.mxu0 0.0
    %109 = vmatpush2.msra.mxu0 0.0
    %110 = vmatprep.subr.mxu0 0.0
    %111 = vmatpush2.msra.mxu0 0.0
    %112 = vmatprep.subr.mxu0 0.0
    %113 = vmatpush2.msra.mxu0 0.0
    %114 = vmatprep.subr.mxu0 0.0
    %115 = vmatpush2.msra.mxu0 0.0
    %116 = vmatprep.subr.mxu0 0.0
    %117 = vmatpush2.msra.mxu0 0.0
    %118 = vmatprep.subr.mxu0 0.0
    %119 = vmatpush2.msra.mxu0 0.0
    %120 = vmatprep.subr.mxu0 0.0
    %121 = vmatpush2.msra.mxu0 0.0
    %122 = vmatprep.subr.mxu0 0.0
    %123 = vmatpush2.msra.mxu0 0.0
    %124 = vmatprep.subr.mxu0 0.0
    %125 = vmatpush2.msra.mxu0 0.0
    %126 = vmatprep.subr.mxu0 0.0
    %127 = vmatpush2.msra.mxu0 0.0
    %128 = vmatprep.subr.mxu0 0.0
    %129 = vmatpush2.msra.mxu0 0.0
    %130 = vmatprep.subr.mxu0 0.0
    %131 = vmatpush2.msra.mxu0 0.0
    %132 = vmatprep.subr.mxu0 0.0
    %133 = vmatpush2.msra.mxu0 0.0
    %134 = vmatprep.subr.mxu0 0.0
    %135 = vmatpush2.msra.mxu0 0.0
    %136 = vmatprep.subr.mxu0 0.0
    %137 = vmatpush2.msra.mxu0 0.0
    %138 = vmatprep.subr.mxu0 0.0
    %139 = vmatpush2.msra.mxu0 0.0
    %140 = vmatprep.mubr.f32.mxu0 0.0
    %141 = vmatmul.mubr.f32.gmra.mxu0 %v74
    %v142 = vpop.f32.mrf.mxu0
    %v143 = vadd.f32 %v55, %v142
    %v144 = vpop.f32.mrf.mxu0
    %v145 = vadd.f32 %v59, %v144
    %146 = vdwg.mxu0
    %147 = vmatprep.subr.mxu0 0.0
    %148 = vmatpush1.msra.mxu0 0.0
    %149 = vmatprep.subr.mxu0 0.0
    %150 = vmatpush1.msra.mxu0 0.0
    %151 = vmatprep.subr.mxu0 0.0
    %152 = vmatpush1.msra.mxu0 0.0
    %153 = vmatprep.subr.mxu0 0.0
    %154 = vmatpush1.msra.mxu0 0.0
    %155 = vmatprep.subr.mxu0 0.0
    %156 = vmatpush1.msra.mxu0 0.0
    %157 = vmatprep.subr.mxu0 0.0
    %158 = vmatpush1.msra.mxu0 0.0
    %159 = vmatprep.subr.mxu0 0.0
    %160 = vmatpush1.msra.mxu0 0.0
    %161 = vmatprep.subr.mxu0 0.0
    %162 = vmatpush1.msra.mxu0 0.0
    %163 = vmatprep.subr.mxu0 0.0
    %164 = vmatpush1.msra.mxu0 0.0
    %165 = vmatprep.subr.mxu0 0.0
    %166 = vmatpush1.msra.mxu0 0.0
    %167 = vmatprep.subr.mxu0 0.0
    %168 = vmatpush1.msra.mxu0 0.0
    %169 = vmatprep.subr.mxu0 0.0
    %170 = vmatpush1.msra.mxu0 0.0
    %171 = vmatprep.subr.mxu0 0.0
    %172 = vmatpush1.msra.mxu0 0.0
    %173 = vmatprep.subr.mxu0 0.0
    %174 = vmatpush1.msra.mxu0 0.0
    %175 = vmatprep.subr.mxu0 %v49
    %176 = vmatpush1.msra.mxu0 %v48
    %177 = vmatprep.subr.mxu0 %v45
    %178 = vmatpush1.msra.mxu0 %v44
    %179 = vmatprep.subr.mxu0 0.0
    %180 = vmatpush2.msra.mxu0 0.0
    %181 = vmatprep.subr.mxu0 0.0
    %182 = vmatpush2.msra.mxu0 0.0
    %183 = vmatprep.subr.mxu0 0.0
    %184 = vmatpush2.msra.mxu0 0.0
    %185 = vmatprep.subr.mxu0 0.0
    %186 = vmatpush2.msra.mxu0 0.0
    %187 = vmatprep.subr.mxu0 0.0
    %188 = vmatpush2.msra.mxu0 0.0
    %189 = vmatprep.subr.mxu0 0.0
    %190 = vmatpush2.msra.mxu0 0.0
    %191 = vmatprep.subr.mxu0 0.0
    %192 = vmatpush2.msra.mxu0 0.0
    %193 = vmatprep.subr.mxu0 0.0
    %194 = vmatpush2.msra.mxu0 0.0
    %195 = vmatprep.subr.mxu0 0.0
    %196 = vmatpush2.msra.mxu0 0.0
    %197 = vmatprep.subr.mxu0 0.0
    %198 = vmatpush2.msra.mxu0 0.0
    %199 = vmatprep.subr.mxu0 0.0
    %200 = vmatpush2.msra.mxu0 0.0
    %201 = vmatprep.subr.mxu0 0.0
    %202 = vmatpush2.msra.mxu0 0.0
    %203 = vmatprep.subr.mxu0 0.0
    %204 = vmatpush2.msra.mxu0 0.0
    %205 = vmatprep.subr.mxu0 0.0
    %206 = vmatpush2.msra.mxu0 0.0
    %207 = vmatprep.subr.mxu0 0.0
    %208 = vmatpush2.msra.mxu0 0.0
    %209 = vmatprep.subr.mxu0 0.0
    %210 = vmatpush2.msra.mxu0 0.0
    %211 = vmatprep.mubr.f32.mxu0 0.0
    %212 = vmatmul.mubr.f32.gmra.mxu0 %v74
    %v213 = vpop.f32.mrf.mxu0
    %v214 = vadd.f32 %v63, %v213
    %v215 = vpop.f32.mrf.mxu0
    %v216 = vadd.f32 %v67, %v215
    %217 = vdwg.mxu0
    %v218 = vld [vmem:[%s3] sm:$0xff]
    %v219 = vld [vmem:[%s3 + $0x8] sm:$0xff]
    %v220 = vld [vmem:[%s3 + $0x10] sm:$0xff]
    %v221 = vld [vmem:[%s3 + $0x18] sm:$0xff]
    %v222 = vld [vmem:[%s3 + $0x20] sm:$0xff]
    %v223 = vld [vmem:[%s3 + $0x28] sm:$0xff]
    %v224 = vld [vmem:[%s3 + $0x30] sm:$0xff]
    %v225 = vld [vmem:[%s3 + $0x38] sm:$0xff]
    %v226 = vld [vmem:[%s3 + $0x40] sm:$0xff]
    %v227 = vld [vmem:[%s3 + $0x48] sm:$0xff]
    %v228 = vld [vmem:[%s3 + $0x50] sm:$0xff]
    %v229 = vld [vmem:[%s3 + $0x58] sm:$0xff]
    %v230 = vld [vmem:[%s3 + $0x60] sm:$0xff]
    %v231 = vld [vmem:[%s3 + $0x68] sm:$0xff]
    %v232 = vld [vmem:[%s3 + $0x70] sm:$0xff]
    %v233 = vld [vmem:[%s3 + $0x78] sm:$0xff]
    %v234 = vld [vmem:[%s3 + $0x80] sm:$0xff]
    %v235 = vld [vmem:[%s3 + $0x88] sm:$0xff]
    %v236 = vld [vmem:[%s3 + $0x90] sm:$0xff]
    %v237 = vld [vmem:[%s3 + $0x98] sm:$0xff]
    %v238 = vld [vmem:[%s3 + $0xa0] sm:$0xff]
    %v239 = vld [vmem:[%s3 + $0xa8] sm:$0xff]
    %v240 = vld [vmem:[%s3 + $0xb0] sm:$0xff]
    %v241 = vld [vmem:[%s3 + $0xb8] sm:$0xff]
    %v242 = vld [vmem:[%s3 + $0xc0] sm:$0xff]
    %v243 = vld [vmem:[%s3 + $0xc8] sm:$0xff]
    %v244 = vld [vmem:[%s3 + $0xd0] sm:$0xff]
    %v245 = vld [vmem:[%s3 + $0xd8] sm:$0xff]
    %v246 = vld [vmem:[%s3 + $0xe0] sm:$0xff]
    %v247 = vld [vmem:[%s3 + $0xe8] sm:$0xff]
    %v248 = vld [vmem:[%s3 + $0xf0] sm:$0xff]
    %v249 = vld [vmem:[%s3 + $0xf8] sm:$0xff]
    %v250 = vld [vmem:[%s3 + $0x100] sm:$0xff]
    %v251 = vld [vmem:[%s3 + $0x108] sm:$0xff]
    %v252 = vld [vmem:[%s3 + $0x110] sm:$0xff]
    %v253 = vld [vmem:[%s3 + $0x118] sm:$0xff]
    %v254 = vld [vmem:[%s3 + $0x120] sm:$0xff]
    %v255 = vld [vmem:[%s3 + $0x128] sm:$0xff]
    %v256 = vld [vmem:[%s3 + $0x130] sm:$0xff]
    %v257 = vld [vmem:[%s3 + $0x138] sm:$0xff]
    %v258 = vld [vmem:[%s3 + $0x140] sm:$0xff]
    %v259 = vld [vmem:[%s3 + $0x148] sm:$0xff]
    %v260 = vld [vmem:[%s3 + $0x150] sm:$0xff]
    %v261 = vld [vmem:[%s3 + $0x158] sm:$0xff]
    %v262 = vld [vmem:[%s3 + $0x160] sm:$0xff]
    %v263 = vld [vmem:[%s3 + $0x168] sm:$0xff]
    %v264 = vld [vmem:[%s3 + $0x170] sm:$0xff]
    %v265 = vld [vmem:[%s3 + $0x178] sm:$0xff]
    %v266 = vld [vmem:[%s3 + $0x180] sm:$0xff]
    %v267 = vld [vmem:[%s3 + $0x188] sm:$0xff]
    %v268 = vld [vmem:[%s3 + $0x190] sm:$0xff]
    %v269 = vld [vmem:[%s3 + $0x198] sm:$0xff]
    %v270 = vld [vmem:[%s3 + $0x1a0] sm:$0xff]
    %v271 = vld [vmem:[%s3 + $0x1a8] sm:$0xff]
    %v272 = vld [vmem:[%s3 + $0x1b0] sm:$0xff]
    %v273 = vld [vmem:[%s3 + $0x1b8] sm:$0xff]
    %v274 = vld [vmem:[%s3 + $0x1c0] sm:$0xff]
    %v275 = vld [vmem:[%s3 + $0x1c8] sm:$0xff]
    %v276 = vld [vmem:[%s3 + $0x1d0] sm:$0xff]
    %v277 = vld [vmem:[%s3 + $0x1d8] sm:$0xff]
    %v278 = vld [vmem:[%s3 + $0x1e0] sm:$0xff]
    %v279 = vld [vmem:[%s3 + $0x1e8] sm:$0xff]
    %v280 = vld [vmem:[%s3 + $0x1f0] sm:$0xff]
    %v281 = vld [vmem:[%s3 + $0x1f8] sm:$0xff]
    %282 = vmatprep.subr.mxu0 %v279
    %283 = vmatpush1.msra.mxu0 %v278
    %284 = vmatprep.subr.mxu0 %v275
    %285 = vmatpush1.msra.mxu0 %v274
    %286 = vmatprep.subr.mxu0 %v271
    %287 = vmatpush1.msra.mxu0 %v270
    %288 = vmatprep.subr.mxu0 %v267
    %289 = vmatpush1.msra.mxu0 %v266
    %290 = vmatprep.subr.mxu0 %v263
    %291 = vmatpush1.msra.mxu0 %v262
    %292 = vmatprep.subr.mxu0 %v259
    %293 = vmatpush1.msra.mxu0 %v258
    %294 = vmatprep.subr.mxu0 %v255
    %295 = vmatpush1.msra.mxu0 %v254
    %296 = vmatprep.subr.mxu0 %v251
    %297 = vmatpush1.msra.mxu0 %v250
    %298 = vmatprep.subr.mxu0 %v247
    %299 = vmatpush1.msra.mxu0 %v246
    %300 = vmatprep.subr.mxu0 %v243
    %301 = vmatpush1.msra.mxu0 %v242
    %302 = vmatprep.subr.mxu0 %v239
    %303 = vmatpush1.msra.mxu0 %v238
    %304 = vmatprep.subr.mxu0 %v235
    %305 = vmatpush1.msra.mxu0 %v234
    %306 = vmatprep.subr.mxu0 %v231
    %307 = vmatpush1.msra.mxu0 %v230
    %308 = vmatprep.subr.mxu0 %v227
    %309 = vmatpush1.msra.mxu0 %v226
    %310 = vmatprep.subr.mxu0 %v223
    %311 = vmatpush1.msra.mxu0 %v222
    %312 = vmatprep.subr.mxu0 %v219
    %313 = vmatpush1.msra.mxu0 %v218
    %314 = vmatprep.subr.mxu0 0.0
    %315 = vmatpush2.msra.mxu0 0.0
    %316 = vmatprep.subr.mxu0 0.0
    %317 = vmatpush2.msra.mxu0 0.0
    %318 = vmatprep.subr.mxu0 0.0
    %319 = vmatpush2.msra.mxu0 0.0
    %320 = vmatprep.subr.mxu0 0.0
    %321 = vmatpush2.msra.mxu0 0.0
    %322 = vmatprep.subr.mxu0 0.0
    %323 = vmatpush2.msra.mxu0 0.0
    %324 = vmatprep.subr.mxu0 0.0
    %325 = vmatpush2.msra.mxu0 0.0
    %326 = vmatprep.subr.mxu0 0.0
    %327 = vmatpush2.msra.mxu0 0.0
    %328 = vmatprep.subr.mxu0 0.0
    %329 = vmatpush2.msra.mxu0 0.0
    %330 = vmatprep.subr.mxu0 0.0
    %331 = vmatpush2.msra.mxu0 0.0
    %332 = vmatprep.subr.mxu0 0.0
    %333 = vmatpush2.msra.mxu0 0.0
    %334 = vmatprep.subr.mxu0 0.0
    %335 = vmatpush2.msra.mxu0 0.0
    %336 = vmatprep.subr.mxu0 0.0
    %337 = vmatpush2.msra.mxu0 0.0
    %338 = vmatprep.subr.mxu0 0.0
    %339 = vmatpush2.msra.mxu0 0.0
    %340 = vmatprep.subr.mxu0 0.0
    %341 = vmatpush2.msra.mxu0 0.0
    %342 = vmatprep.subr.mxu0 0.0
    %343 = vmatpush2.msra.mxu0 0.0
    %344 = vmatprep.subr.mxu0 0.0
    %345 = vmatpush2.msra.mxu0 0.0
    %346 = vmatprep.mubr.f32.mxu0 0.0
    %347 = vmatmul.mubr.f32.gmra.mxu0 %v37
    %v348 = vpop.f32.mrf.mxu0
    %v349 = vadd.f32 0.0, %v348
    %v350 = vpop.f32.mrf.mxu0
    %v351 = vadd.f32 0.0, %v350
    %352 = vdwg.mxu0
    %353 = vmatprep.subr.mxu0 %v281
    %354 = vmatpush1.msra.mxu0 %v280
    %355 = vmatprep.subr.mxu0 %v277
    %356 = vmatpush1.msra.mxu0 %v276
    %357 = vmatprep.subr.mxu0 %v273
    %358 = vmatpush1.msra.mxu0 %v272
    %359 = vmatprep.subr.mxu0 %v269
    %360 = vmatpush1.msra.mxu0 %v268
    %361 = vmatprep.subr.mxu0 %v265
    %362 = vmatpush1.msra.mxu0 %v264
    %363 = vmatprep.subr.mxu0 %v261
    %364 = vmatpush1.msra.mxu0 %v260
    %365 = vmatprep.subr.mxu0 %v257
    %366 = vmatpush1.msra.mxu0 %v256
    %367 = vmatprep.subr.mxu0 %v253
    %368 = vmatpush1.msra.mxu0 %v252
    %369 = vmatprep.subr.mxu0 %v249
    %370 = vmatpush1.msra.mxu0 %v248
    %371 = vmatprep.subr.mxu0 %v245
    %372 = vmatpush1.msra.mxu0 %v244
    %373 = vmatprep.subr.mxu0 %v241
    %374 = vmatpush1.msra.mxu0 %v240
    %375 = vmatprep.subr.mxu0 %v237
    %376 = vmatpush1.msra.mxu0 %v236
    %377 = vmatprep.subr.mxu0 %v233
    %378 = vmatpush1.msra.mxu0 %v232
    %379 = vmatprep.subr.mxu0 %v229
    %380 = vmatpush1.msra.mxu0 %v228
    %381 = vmatprep.subr.mxu0 %v225
    %382 = vmatpush1.msra.mxu0 %v224
    %383 = vmatprep.subr.mxu0 %v221
    %384 = vmatpush1.msra.mxu0 %v220
    %385 = vmatprep.subr.mxu0 0.0
    %386 = vmatpush2.msra.mxu0 0.0
    %387 = vmatprep.subr.mxu0 0.0
    %388 = vmatpush2.msra.mxu0 0.0
    %389 = vmatprep.subr.mxu0 0.0
    %390 = vmatpush2.msra.mxu0 0.0
    %391 = vmatprep.subr.mxu0 0.0
    %392 = vmatpush2.msra.mxu0 0.0
    %393 = vmatprep.subr.mxu0 0.0
    %394 = vmatpush2.msra.mxu0 0.0
    %395 = vmatprep.subr.mxu0 0.0
    %396 = vmatpush2.msra.mxu0 0.0
    %397 = vmatprep.subr.mxu0 0.0
    %398 = vmatpush2.msra.mxu0 0.0
    %399 = vmatprep.subr.mxu0 0.0
    %400 = vmatpush2.msra.mxu0 0.0
    %401 = vmatprep.subr.mxu0 0.0
    %402 = vmatpush2.msra.mxu0 0.0
    %403 = vmatprep.subr.mxu0 0.0
    %404 = vmatpush2.msra.mxu0 0.0
    %405 = vmatprep.subr.mxu0 0.0
    %406 = vmatpush2.msra.mxu0 0.0
    %407 = vmatprep.subr.mxu0 0.0
    %408 = vmatpush2.msra.mxu0 0.0
    %409 = vmatprep.subr.mxu0 0.0
    %410 = vmatpush2.msra.mxu0 0.0
    %411 = vmatprep.subr.mxu0 0.0
    %412 = vmatpush2.msra.mxu0 0.0
    %413 = vmatprep.subr.mxu0 0.0
    %414 = vmatpush2.msra.mxu0 0.0
    %415 = vmatprep.subr.mxu0 0.0
    %416 = vmatpush2.msra.mxu0 0.0
    %417 = vmatprep.mubr.f32.mxu0 0.0
    %418 = vmatmul.mubr.f32.gmra.mxu0 %v37
    %v419 = vpop.f32.mrf.mxu0
    %v420 = vadd.f32 0.0, %v419
    %v421 = vpop.f32.mrf.mxu0
    %v422 = vadd.f32 0.0, %v421
    %423 = vdwg.mxu0
    %v424 = vadd.f32 %v143, %v349
    %v425 = vadd.f32 %v145, %v351
    %v426 = vadd.f32 %v214, %v420
    %v427 = vadd.f32 %v216, %v422
    %v428 = vxor.u32 %v424, 2147483648
    %v429 = vxor.u32 %v425, 2147483648
    %v430 = vxor.u32 %v426, 2147483648
    %v431 = vmul.f32 %v428, 1.442695
    %v432 = vpow.pop %v431
    %v433 = vmul.f32 %v429, 1.442695
    %v434 = vpow.pop %v433
    %v435 = vmul.f32 %v430, 1.442695
    %v436 = vpow.pop %v435
    %v437 = vadd.f32 %v432, 1.0
    %v438 = vadd.f32 %v434, 1.0
    %v439 = vadd.f32 %v436, 1.0
    %v440 = vrcp.pop %v437
    %v441 = vmul.f32 1.0, %v440
    %v442 = vrcp.pop %v438
    %v443 = vmul.f32 1.0, %v442
    %v444 = vrcp.pop %v439
    %v445 = vmul.f32 1.0, %v444
    %v446 = vtanh.pop %v427
    %v447 = vmul.f32 %v443, %v38
    %v448 = vmul.f32 %v441, %v446
    %v449 = vadd.f32 %v447, %v448
    %v450 = vtanh.pop %v449
    %v451 = vmul.f32 %v445, %v450
  $region34: #{lstm_forward.1} parent=0 // loop_footer
    %s36 = sadd.s32 1, %s32
  $region35: #{lstm_forward.1} parent=0 // loop_footer_branch
    %31 = sbr.rel target = $region31
  $region36: #{lstm_forward.1} parent=0 // loop_exit
    _
  %452 = vst [vmem:[#allocation2] sm:$0xff] %v37
  %453 = vst [vmem:[#allocation3] sm:$0xff] %v38
  // Predicated region
  $region37: #{lstm_forward.1} parent=0 // pred_check
    %p454 = pneg %p23
  $region38: #{lstm_forward.1} parent=0 // pred_check_branch
    %456 = sbr.rel (%p454) target = $region40
  $region39: #{lstm_forward.1} parent=0 // pred_region
    %v457 = vld [vmem:[%s4] sm:$0xff]
    %v458 = vld [vmem:[%s4 + $0x8] sm:$0xff]
    %v459 = vld [vmem:[%s4 + $0x10] sm:$0xff]
    %v460 = vld [vmem:[%s4 + $0x18] sm:$0xff]
    %v461 = vld [vmem:[%s4 + $0x20] sm:$0xff]
    %v462 = vld [vmem:[%s4 + $0x28] sm:$0xff]
    %v463 = vld [vmem:[%s4 + $0x30] sm:$0xff]
    %v464 = vld [vmem:[%s4 + $0x38] sm:$0xff]
    %v465 = vld [vmem:[%s4 + $0x40] sm:$0xff]
    %v466 = vld [vmem:[%s4 + $0x48] sm:$0xff]
    %v467 = vld [vmem:[%s4 + $0x50] sm:$0xff]
    %v468 = vld [vmem:[%s4 + $0x58] sm:$0xff]
    %v469 = vld [vmem:[%s4 + $0x60] sm:$0xff]
    %v470 = vld [vmem:[%s4 + $0x68] sm:$0xff]
    %v471 = vld [vmem:[%s4 + $0x70] sm:$0xff]
    %v472 = vld [vmem:[%s4 + $0x78] sm:$0xff]
    %v473 = vld [vmem:[%s5] sm:$0x1]
    %v475 = vlaneseq
    %v476 = vshrl.u32 %v475, 7
    %v477 = vsub.s32 0, %v476
    %v478 = vrot.slane %v473, %v477
    %480 = vmatprep.subr.mxu0 0.0
    %481 = vmatpush1.msra.mxu0 %v472
    %482 = vmatprep.subr.mxu0 0.0
    %483 = vmatpush1.msra.mxu0 %v471
    %484 = vmatprep.subr.mxu0 0.0
    %485 = vmatpush1.msra.mxu0 %v470
    %486 = vmatprep.subr.mxu0 0.0
    %487 = vmatpush1.msra.mxu0 %v469
    %488 = vmatprep.subr.mxu0 0.0
    %489 = vmatpush1.msra.mxu0 %v468
    %490 = vmatprep.subr.mxu0 0.0
    %491 = vmatpush1.msra.mxu0 %v467
    %492 = vmatprep.subr.mxu0 0.0
    %493 = vmatpush1.msra.mxu0 %v466
    %494 = vmatprep.subr.mxu0 0.0
    %495 = vmatpush1.msra.mxu0 %v465
    %496 = vmatprep.subr.mxu0 0.0
    %497 = vmatpush1.msra.mxu0 %v464
    %498 = vmatprep.subr.mxu0 0.0
    %499 = vmatpush1.msra.mxu0 %v463
    %500 = vmatprep.subr.mxu0 0.0
    %501 = vmatpush1.msra.mxu0 %v462
    %502 = vmatprep.subr.mxu0 0.0
    %503 = vmatpush1.msra.mxu0 %v461
    %504 = vmatprep.subr.mxu0 0.0
    %505 = vmatpush1.msra.mxu0 %v460
    %506 = vmatprep.subr.mxu0 0.0
    %507 = vmatpush1.msra.mxu0 %v459
    %508 = vmatprep.subr.mxu0 0.0
    %509 = vmatpush1.msra.mxu0 %v458
    %510 = vmatprep.subr.mxu0 0.0
    %511 = vmatpush1.msra.mxu0 %v457
    %512 = vmatprep.subr.mxu0 0.0
    %513 = vmatpush2.msra.mxu0 0.0
    %514 = vmatprep.subr.mxu0 0.0
    %515 = vmatpush2.msra.mxu0 0.0
    %516 = vmatprep.subr.mxu0 0.0
    %517 = vmatpush2.msra.mxu0 0.0
    %518 = vmatprep.subr.mxu0 0.0
    %519 = vmatpush2.msra.mxu0 0.0
    %520 = vmatprep.subr.mxu0 0.0
    %521 = vmatpush2.msra.mxu0 0.0
    %522 = vmatprep.subr.mxu0 0.0
    %523 = vmatpush2.msra.mxu0 0.0
    %524 = vmatprep.subr.mxu0 0.0
    %525 = vmatpush2.msra.mxu0 0.0
    %526 = vmatprep.subr.mxu0 0.0
    %527 = vmatpush2.msra.mxu0 0.0
    %528 = vmatprep.subr.mxu0 0.0
    %529 = vmatpush2.msra.mxu0 0.0
    %530 = vmatprep.subr.mxu0 0.0
    %531 = vmatpush2.msra.mxu0 0.0
    %532 = vmatprep.subr.mxu0 0.0
    %533 = vmatpush2.msra.mxu0 0.0
    %534 = vmatprep.subr.mxu0 0.0
    %535 = vmatpush2.msra.mxu0 0.0
    %536 = vmatprep.subr.mxu0 0.0
    %537 = vmatpush2.msra.mxu0 0.0
    %538 = vmatprep.subr.mxu0 0.0
    %539 = vmatpush2.msra.mxu0 0.0
    %540 = vmatprep.subr.mxu0 0.0
    %541 = vmatpush2.msra.mxu0 0.0
    %542 = vmatprep.subr.mxu0 0.0
    %543 = vmatpush2.msra.mxu0 0.0
    %544 = vmatprep.mubr.f32.mxu0 0.0
    %545 = vmatmul.mubr.f32.gmra.mxu0 %v37
    %v546 = vpop.f32.mrf.mxu0
    %v547 = vadd.f32 %v478, %v546
    %v548 = vpop.f32.mrf.mxu0
    %549 = vdwg.mxu0
    %550 = vst [vmem:[%s6] sm:$0xff] %v547
  $region40: #{lstm_forward.1} parent=0 // pred_fallthru
    _
  // Predicated region
  $region41: #{lstm_forward.1} parent=0 // pred_check
    _
  $region42: #{lstm_forward.1} parent=0 // pred_check_branch
    %552 = sbr.rel (0) target = $region44
  $region43: #{lstm_forward.1} parent=0 // pred_region
    _
  $region44: #{lstm_forward.1} parent=0 // pred_fallthru
    _
  // Predicated region
  $region45: #{lstm_forward.1} parent=0 // pred_check
    _
  $region46: #{lstm_forward.1} parent=0 // pred_check_branch
    %554 = sbr.rel (0) target = $region48
  $region47: #{lstm_forward.1} parent=0 // pred_region
    _
  $region48: #{lstm_forward.1} parent=0 // pred_fallthru
    _

</llo_original>
